<compile_context>
chip_gen: v5e
topology: v5e:2x2
jax: 0.10.0
libtpu: 0.0.40
codegen_flags: <defaults>
</compile_context>

<pallas_src>
import functools

import jax
import jax.numpy as jnp
from jax.experimental import pallas as pl
from jax.experimental.pallas import tpu as pltpu

HIDDEN = 256


def _round_up(x, m):
    return ((x + m - 1) // m) * m


def _device_defaults():
    """(num_parallel_tensorcores, bf16_epilogue) from the attached TPU kind."""
    try:
        kind = jax.devices()[0].device_kind.lower()
    except Exception:
        return 1, False
    two_core = any(t in kind for t in ("v7", "v4", "v5p"))
    bf16_ok = any(t in kind for t in ("v6", "v7"))
    return (2 if two_core else 1), bf16_ok


def _q_kernel(xt_ref, w1t_ref, b1_ref, w2t_ref, b2_ref, w3t_ref, b3_ref, o_ref,
              *, bf16_epilogue):
    # fc1: (256, obs+act) @ (obs+act, TB) -> (256, TB), f32 accumulation.
    acc1 = jnp.dot(w1t_ref[...], xt_ref[...],
                   preferred_element_type=jnp.float32)
    if bf16_epilogue:   # bf16 VPU epilogue (v6e/v7x)
        h1 = jnp.maximum(acc1.astype(jnp.bfloat16)
                         + b1_ref[...].astype(jnp.bfloat16), 0)
    else:               # f32 epilogue (v5e has no bf16 VPU)
        h1 = jnp.maximum(acc1 + b1_ref[...], 0.0).astype(jnp.bfloat16)

    # fc2: (256, 256) @ (256, TB) -> (256, TB)
    acc2 = jnp.dot(w2t_ref[...], h1, preferred_element_type=jnp.float32)
    if bf16_epilogue:
        h2 = jnp.maximum(acc2.astype(jnp.bfloat16)
                         + b2_ref[...].astype(jnp.bfloat16), 0)
    else:
        h2 = jnp.maximum(acc2 + b2_ref[...], 0.0)

    # fc3: M=1 matvec -> lane-dense (1, TB) row; bias is an SMEM scalar.
    q = jnp.dot(w3t_ref[...].astype(h2.dtype), h2,
                preferred_element_type=jnp.float32)
    o_ref[...] = q + b3_ref[0]


@functools.partial(
    jax.jit,
    static_argnames=("obs_dim", "act_dim", "block_b", "num_cores",
                     "bf16_epilogue"))
def _q_forward_impl(s, a, prepared, *, obs_dim, act_dim, block_b, num_cores,
                    bf16_epilogue):
    s = s.reshape(-1, obs_dim).astype(jnp.float32)
    a = a.reshape(-1, act_dim).astype(jnp.float32)
    B = s.shape[0]
    in_dim = obs_dim + act_dim

    # ---- batch tile selection (static under jit) --------------------------
    # Batch sits in the lane dimension -> tile must be a multiple of 128.
    b128 = _round_up(max(B, 1), 128)
    tb = min(_round_up(max(block_b, 128), 128), b128)
    if num_cores > 1:
        # Leave >= num_cores grid steps so ("parallel",) can shard the batch
        # axis across TensorCores (v7x / megacore parts).
        per_core = _round_up((b128 + num_cores - 1) // num_cores, 128)
        tb = min(tb, max(per_core, 128))
    b_pad = _round_up(B, tb)
    grid = (b_pad // tb,)

    # ---- activations: fused concat + transpose + pad + bf16 cast ----------
    xt = jnp.concatenate([s, a], axis=-1).T                  # (in_dim, B)
    xt = jnp.pad(xt, ((0, 0), (0, b_pad - B))).astype(jnp.bfloat16)

    resident = lambda shape: pl.BlockSpec(shape, lambda i: (0, 0))
    kernel = functools.partial(_q_kernel, bf16_epilogue=bf16_epilogue)

    out = pl.pallas_call(
        kernel,
        out_shape=jax.ShapeDtypeStruct((1, b_pad), jnp.float32),
        grid=grid,
        in_specs=[
            pl.BlockSpec((in_dim, tb), lambda i: (0, i)),       # x^T tile (bf16)
            resident((HIDDEN, in_dim)),                         # w1^T (bf16)
            resident((HIDDEN, 1)),                              # b1   (f32)
            resident((HIDDEN, HIDDEN)),                         # w2^T (bf16)
            resident((HIDDEN, 1)),                              # b2   (f32)
            resident((1, HIDDEN)),                              # w3 row (f32)
            pl.BlockSpec(memory_space=pltpu.MemorySpace.SMEM),  # b3 scalar
        ],
        out_specs=pl.BlockSpec((1, tb), lambda i: (0, i)),
        compiler_params=pltpu.CompilerParams(
            dimension_semantics=("parallel",)),
    )(xt, prepared["w1t"], prepared["b1t"], prepared["w2t"],
      prepared["b2t"], prepared["w3t"], prepared["b3"])

    return out[0, :B].reshape(B, 1)


def q_forward(s, a, prepared_params, obs_dim, act_dim, *, block_b=1024,
              num_cores=None, bf16_epilogue=None):
    """Forward pass matching the PyTorch Q module.

    `prepared_params` must come from prepare_params(params) — compute it once
    and reuse it across calls (weight casts/transposes are NOT redone here).
    """
    if num_cores is None or bf16_epilogue is None:
        auto_cores, auto_bf16 = _device_defaults()
        num_cores = auto_cores if num_cores is None else num_cores
        bf16_epilogue = auto_bf16 if bf16_epilogue is None else bf16_epilogue
    return _q_forward_impl(s, a, prepared_params, obs_dim=obs_dim,
                           act_dim=act_dim, block_b=int(block_b),
                           num_cores=int(num_cores),
                           bf16_epilogue=bool(bf16_epilogue))


def prepare_params(params):
    """One-time weight preprocessing (hoisted out of the forward pass)."""
    w1, b1, w2, b2, w3, b3 = params
    return {
        "w1t": jnp.asarray(w1.T, jnp.bfloat16),          # (256, obs+act)
        "b1t": jnp.asarray(b1.reshape(-1, 1), jnp.float32),  # (256, 1)
        "w2t": jnp.asarray(w2.T, jnp.bfloat16),          # (256, 256)
        "b2t": jnp.asarray(b2.reshape(-1, 1), jnp.float32),  # (256, 1)
        "w3t": jnp.asarray(w3.reshape(1, -1), jnp.float32),  # (1, 256)
        "b3": jnp.asarray(b3.reshape(-1), jnp.float32),      # (1,)
    }


def init_params(key, obs_dim, act_dim):
    """Deterministic init mimicking nn.Linear's U(-1/sqrt(fan_in), 1/sqrt(fan_in))."""
    in_dim = obs_dim + act_dim
    ks = jax.random.split(key, 6)

    def lin(kw, kb, fan_in, fan_out):
        bound = 1.0 / jnp.sqrt(fan_in)
        w = jax.random.uniform(kw, (fan_in, fan_out), jnp.float32, -bound, bound)
        b = jax.random.uniform(kb, (1, fan_out), jnp.float32, -bound, bound)
        return w, b

    w1, b1 = lin(ks[0], ks[1], in_dim, HIDDEN)
    w2, b2 = lin(ks[2], ks[3], HIDDEN, HIDDEN)
    w3, b3 = lin(ks[4], ks[5], HIDDEN, 1)
    return (w1, b1, w2, b2, w3, b3)


def _ref_forward(s, a, params, obs_dim, act_dim):
    """Pure-JAX fp32 reference mirroring the PyTorch module exactly."""
    w1, b1, w2, b2, w3, b3 = params
    x = jnp.concatenate(
        [s.reshape(-1, obs_dim), a.reshape(-1, act_dim)], axis=-1)
    h1 = jnp.maximum(x @ w1 + b1, 0.0)
    h2 = jnp.maximum(h1 @ w2 + b2, 0.0)
    return h2 @ w3 + b3


if __name__ == "__main__":
    obs_dim, act_dim = 16, 4

    key = jax.random.PRNGKey(0)
    k_s, k_a, k_p, k_s2, k_a2 = jax.random.split(key, 5)
    params = init_params(k_p, obs_dim, act_dim)
    prepared = prepare_params(params)   # done ONCE, reused across calls

    # Small batch (single tile).
    batch = 8
    s = jax.random.normal(k_s, (batch, obs_dim), jnp.float32)
    a = jax.random.normal(k_a, (batch, act_dim), jnp.float32)
    q = jax.block_until_ready(q_forward(s, a, prepared, obs_dim, act_dim))
    assert q.shape == (batch, 1)
    ref = _ref_forward(s, a, params, obs_dim, act_dim)
    assert jnp.allclose(q, ref, atol=2.5e-2, rtol=2.5e-2), (
        f"max abs diff {jnp.max(jnp.abs(q - ref))}")

    # Larger batch forcing a multi-step grid (block_b=128 -> 3 tiles of 128).
    batch2 = 300
    s2 = jax.random.normal(k_s2, (batch2, obs_dim), jnp.float32)
    a2 = jax.random.normal(k_a2, (batch2, act_dim), jnp.float32)
    q2 = jax.block_until_ready(
        q_forward(s2, a2, prepared, obs_dim, act_dim, block_b=128))
    assert q2.shape == (batch2, 1)
    ref2 = _ref_forward(s2, a2, params, obs_dim, act_dim)
    assert jnp.allclose(q2, ref2, atol=2.5e-2, rtol=2.5e-2), (
        f"max abs diff {jnp.max(jnp.abs(q2 - ref2))}")

    print("KERNEL_OK")
</pallas_src>

<mosaic_0001>
module attributes {stable_mosaic.version = 11 : i64} {
  func.func @_q_kernel(%arg0: i32, %arg1: memref<20x128xbf16, #tpu.memory_space<vmem>>, %arg2: memref<256x20xbf16, #tpu.memory_space<vmem>>, %arg3: memref<256x1xf32, #tpu.memory_space<vmem>>, %arg4: memref<256x256xbf16, #tpu.memory_space<vmem>>, %arg5: memref<256x1xf32, #tpu.memory_space<vmem>>, %arg6: memref<1x256xf32, #tpu.memory_space<vmem>>, %arg7: memref<1xf32, #tpu.memory_space<smem>>, %arg8: memref<1x128xf32, #tpu.memory_space<vmem>>) attributes {dimension_semantics = [#tpu.dimension_semantics<parallel>], iteration_bounds = array<i64: 1>, scalar_prefetch = 0 : i64, scratch_operands = 0 : i64, tpu.core_type = #tpu.core_type<tc>, window_params = [{transform_indices = @transform_0, window_bounds = array<i64: 20, 128>}, {pipeline_mode = #tpu.pipeline_mode<synchronous>, transform_indices = @transform_1, window_bounds = array<i64: 256, 20>}, {pipeline_mode = #tpu.pipeline_mode<synchronous>, transform_indices = @transform_2, window_bounds = array<i64: 256, 1>}, {pipeline_mode = #tpu.pipeline_mode<synchronous>, transform_indices = @transform_3, window_bounds = array<i64: 256, 256>}, {pipeline_mode = #tpu.pipeline_mode<synchronous>, transform_indices = @transform_4, window_bounds = array<i64: 256, 1>}, {pipeline_mode = #tpu.pipeline_mode<synchronous>, transform_indices = @transform_5, window_bounds = array<i64: 1, 256>}, {transform_indices = @transform_6, window_bounds = array<i64: 1>}, {transform_indices = @transform_7, window_bounds = array<i64: 1, 128>}]} {
    %c0 = arith.constant 0 : index
    %c0_0 = arith.constant 0 : index
    %0 = vector.load %arg2[%c0, %c0_0] : memref<256x20xbf16, #tpu.memory_space<vmem>>, vector<256x20xbf16>
    %c0_1 = arith.constant 0 : index
    %c0_2 = arith.constant 0 : index
    %1 = vector.load %arg1[%c0_1, %c0_2] : memref<20x128xbf16, #tpu.memory_space<vmem>>, vector<20x128xbf16>
    %cst = arith.constant dense<0.000000e+00> : vector<256x128xf32>
    %2 = tpu.matmul %0, %1, %cst {dimension_numbers = #tpu.dot_dimension_numbers<[1], [0], [0], [1], [0, 0, 1, 1], [], []>} : vector<256x20xbf16>, vector<20x128xbf16>, vector<256x128xf32> -> vector<256x128xf32>
    %c0_3 = arith.constant 0 : index
    %c0_4 = arith.constant 0 : index
    %3 = vector.load %arg3[%c0_3, %c0_4] : memref<256x1xf32, #tpu.memory_space<vmem>>, vector<256x1xf32>
    %4 = vector.broadcast %3 : vector<256x1xf32> to vector<256x128xf32>
    %5 = arith.addf %2, %4 : vector<256x128xf32>
    %cst_5 = arith.constant 0.000000e+00 : f32
    %6 = vector.broadcast %cst_5 : f32 to vector<256x128xf32>
    %7 = arith.maximumf %5, %6 : vector<256x128xf32>
    %8 = arith.truncf %7 : vector<256x128xf32> to vector<256x128xbf16>
    %c0_6 = arith.constant 0 : index
    %c0_7 = arith.constant 0 : index
    %9 = vector.load %arg4[%c0_6, %c0_7] : memref<256x256xbf16, #tpu.memory_space<vmem>>, vector<256x256xbf16>
    %cst_8 = arith.constant dense<0.000000e+00> : vector<256x128xf32>
    %10 = tpu.matmul %9, %8, %cst_8 {dimension_numbers = #tpu.dot_dimension_numbers<[1], [0], [0], [1], [0, 0, 1, 1], [], []>} : vector<256x256xbf16>, vector<256x128xbf16>, vector<256x128xf32> -> vector<256x128xf32>
    %c0_9 = arith.constant 0 : index
    %c0_10 = arith.constant 0 : index
    %11 = vector.load %arg5[%c0_9, %c0_10] : memref<256x1xf32, #tpu.memory_space<vmem>>, vector<256x1xf32>
    %12 = vector.broadcast %11 : vector<256x1xf32> to vector<256x128xf32>
    %13 = arith.addf %10, %12 : vector<256x128xf32>
    %cst_11 = arith.constant 0.000000e+00 : f32
    %14 = vector.broadcast %cst_11 : f32 to vector<256x128xf32>
    %15 = arith.maximumf %13, %14 : vector<256x128xf32>
    %c0_12 = arith.constant 0 : index
    %c0_13 = arith.constant 0 : index
    %16 = vector.load %arg6[%c0_12, %c0_13] : memref<1x256xf32, #tpu.memory_space<vmem>>, vector<1x256xf32>
    %cst_14 = arith.constant dense<0.000000e+00> : vector<1x128xf32>
    %17 = tpu.matmul %16, %15, %cst_14 {dimension_numbers = #tpu.dot_dimension_numbers<[1], [0], [0], [1], [0, 0, 1, 1], [], []>} : vector<1x256xf32>, vector<256x128xf32>, vector<1x128xf32> -> vector<1x128xf32>
    %c0_15 = arith.constant 0 : index
    %18 = memref.load %arg7[%c0_15] : memref<1xf32, #tpu.memory_space<smem>>
    %19 = vector.broadcast %18 : f32 to vector<1x128xf32>
    %20 = arith.addf %17, %19 : vector<1x128xf32>
    %c0_16 = arith.constant 0 : index
    %c0_17 = arith.constant 0 : index
    %21 = vector.load %arg8[%c0_16, %c0_17] : memref<1x128xf32, #tpu.memory_space<vmem>>, vector<1x128xf32>
    tpu.vector_store %arg8[%c0_16, %c0_17], %20 {strides = array<i32>} : memref<1x128xf32, #tpu.memory_space<vmem>>, vector<1x128xf32>,
    return
  }
  func.func @transform_0(%arg0: i32) -> (i32, i32) {
    %c0_i32 = arith.constant 0 : i32
    %c0_i32_0 = arith.constant 0 : i32
    return %c0_i32, %arg0 : i32, i32
  }
  func.func @transform_1(%arg0: i32) -> (i32, i32) {
    %c0_i32 = arith.constant 0 : i32
    %c0_i32_0 = arith.constant 0 : i32
    %c0_i32_1 = arith.constant 0 : i32
    return %c0_i32, %c0_i32_0 : i32, i32
  }
  func.func @transform_2(%arg0: i32) -> (i32, i32) {
    %c0_i32 = arith.constant 0 : i32
    %c0_i32_0 = arith.constant 0 : i32
    %c0_i32_1 = arith.constant 0 : i32
    return %c0_i32, %c0_i32_0 : i32, i32
  }
  func.func @transform_3(%arg0: i32) -> (i32, i32) {
    %c0_i32 = arith.constant 0 : i32
    %c0_i32_0 = arith.constant 0 : i32
    %c0_i32_1 = arith.constant 0 : i32
    return %c0_i32, %c0_i32_0 : i32, i32
  }
  func.func @transform_4(%arg0: i32) -> (i32, i32) {
    %c0_i32 = arith.constant 0 : i32
    %c0_i32_0 = arith.constant 0 : i32
    %c0_i32_1 = arith.constant 0 : i32
    return %c0_i32, %c0_i32_0 : i32, i32
  }
  func.func @transform_5(%arg0: i32) -> (i32, i32) {
    %c0_i32 = arith.constant 0 : i32
    %c0_i32_0 = arith.constant 0 : i32
    %c0_i32_1 = arith.constant 0 : i32
    return %c0_i32, %c0_i32_0 : i32, i32
  }
  func.func @transform_6(%arg0: i32) -> i32 {
    %c0_i32 = arith.constant 0 : i32
    %c0_i32_0 = arith.constant 0 : i32
    return %c0_i32 : i32
  }
  func.func @transform_7(%arg0: i32) -> (i32, i32) {
    %c0_i32 = arith.constant 0 : i32
    %c0_i32_0 = arith.constant 0 : i32
    return %c0_i32, %arg0 : i32, i32
  }
}

</mosaic_0001>

<llo_original>
// kernel: _q_forward_impl.1
$region0: #{_q_forward_impl.1}
  #allocation0 [shape = 'u32[]', space=smem, size = 0x4, offset = 0x4, fixed_abs, tag = 'smem constant byte address 0x4 - core index']
  #allocation1 [shape = 'u32[72,128]{1,0:T(1,128)}', space=vmem, size = 0x9000, scoped, tag = 'internal scratch']
  #allocation2 [shape = 'f32[1]{0:T(128)S(6)}', space=smem, size = 0x200, scoped, tag = 'scoped memory for _q_forward_impl.1']
  %s0 = inlined_call_operand.vmem [shape: bf16[20,128], index: 0, kind: input, shape index: {}]
  %s1 = inlined_call_operand.vmem [shape: bf16[256,20], index: 1, kind: input, shape index: {}]
  %s2 = inlined_call_operand.vmem [shape: f32[256,1], index: 2, kind: input, shape index: {}]
  %s3 = inlined_call_operand.vmem [shape: bf16[256,256], index: 3, kind: input, shape index: {}]
  %s4 = inlined_call_operand.vmem [shape: f32[256,1], index: 4, kind: input, shape index: {}]
  %s5 = inlined_call_operand.vmem [shape: f32[1,256], index: 5, kind: input, shape index: {}]
  %s6 = inlined_call_operand.<no memory space> [shape: f32[1], index: 6, kind: input, shape index: {}]
  %s7 = inlined_call_operand.vmem [shape: f32[1,128], index: 7, kind: output, shape index: {}]
  %s8 = sld [smem:[#allocation0]]
  $region38: #{_q_forward_impl.1} parent=0
    _
  %s10 = ssub.s32 1, %s8
  %s11 = scalar_select 0, %s10, %s8
  %12 = sst [smem:[#allocation2]] %s6
  // Predicated region
  $region2: #{_q_forward_impl.1} parent=0 // pred_check
    _
  $region3: #{_q_forward_impl.1} parent=0 // pred_check_branch
    %14 = sbr.rel (0) target = $region5
  $region4: #{_q_forward_impl.1} parent=0 // pred_region
    _
  $region5: #{_q_forward_impl.1} parent=0 // pred_fallthru
    _
  // Predicated region
  $region6: #{_q_forward_impl.1} parent=0 // pred_check
    _
  $region7: #{_q_forward_impl.1} parent=0 // pred_check_branch
    %16 = sbr.rel (0) target = $region9
  $region8: #{_q_forward_impl.1} parent=0 // pred_region
    _
  $region9: #{_q_forward_impl.1} parent=0 // pred_fallthru
    _
  // Predicated region
  $region10: #{_q_forward_impl.1} parent=0 // pred_check
    _
  $region11: #{_q_forward_impl.1} parent=0 // pred_check_branch
    %18 = sbr.rel (0) target = $region13
  $region12: #{_q_forward_impl.1} parent=0 // pred_region
    _
  $region13: #{_q_forward_impl.1} parent=0 // pred_fallthru
    _
  // Predicated region
  $region14: #{_q_forward_impl.1} parent=0 // pred_check
    _
  $region15: #{_q_forward_impl.1} parent=0 // pred_check_branch
    %20 = sbr.rel (0) target = $region17
  $region16: #{_q_forward_impl.1} parent=0 // pred_region
    _
  $region17: #{_q_forward_impl.1} parent=0 // pred_fallthru
    _
  // Predicated region
  $region18: #{_q_forward_impl.1} parent=0 // pred_check
    _
  $region19: #{_q_forward_impl.1} parent=0 // pred_check_branch
    %22 = sbr.rel (0) target = $region21
  $region20: #{_q_forward_impl.1} parent=0 // pred_region
    _
  $region21: #{_q_forward_impl.1} parent=0 // pred_fallthru
    _
  // Predicated region
  $region22: #{_q_forward_impl.1} parent=0 // pred_check
    _
  $region23: #{_q_forward_impl.1} parent=0 // pred_check_branch
    %24 = sbr.rel (0) target = $region25
  $region24: #{_q_forward_impl.1} parent=0 // pred_region
    _
  $region25: #{_q_forward_impl.1} parent=0 // pred_fallthru
    _
  // Predicated region
  $region26: #{_q_forward_impl.1} parent=0 // pred_check
    _
  $region27: #{_q_forward_impl.1} parent=0 // pred_check_branch
    %26 = sbr.rel (0) target = $region29
  $region28: #{_q_forward_impl.1} parent=0 // pred_region
    _
  $region29: #{_q_forward_impl.1} parent=0 // pred_fallthru
    _
  %v28 = vld [vmem:[%s1] sm:$0xf]
  %v29 = vld [vmem:[%s1 + $0x4] sm:$0xf]
  %v30 = vld [vmem:[%s1 + $0x8] sm:$0xf]
  %v31 = vld [vmem:[%s1 + $0xc] sm:$0xf]
  %v32 = vld [vmem:[%s1 + $0x10] sm:$0xf]
  %v33 = vld [vmem:[%s1 + $0x14] sm:$0xf]
  %v34 = vld [vmem:[%s1 + $0x18] sm:$0xf]
  %v35 = vld [vmem:[%s1 + $0x1c] sm:$0xf]
  %v36 = vld [vmem:[%s1 + $0x20] sm:$0xf]
  %v37 = vld [vmem:[%s1 + $0x24] sm:$0xf]
  %v38 = vld [vmem:[%s1 + $0x28] sm:$0xf]
  %v39 = vld [vmem:[%s1 + $0x2c] sm:$0xf]
  %v40 = vld [vmem:[%s1 + $0x30] sm:$0xf]
  %v41 = vld [vmem:[%s1 + $0x34] sm:$0xf]
  %v42 = vld [vmem:[%s1 + $0x38] sm:$0xf]
  %v43 = vld [vmem:[%s1 + $0x3c] sm:$0xf]
  %v44 = vld [vmem:[%s1 + $0x40] sm:$0xf]
  %v45 = vld [vmem:[%s1 + $0x44] sm:$0xf]
  %v46 = vld [vmem:[%s1 + $0x48] sm:$0xf]
  %v47 = vld [vmem:[%s1 + $0x4c] sm:$0xf]
  %v48 = vld [vmem:[%s1 + $0x50] sm:$0xf]
  %v49 = vld [vmem:[%s1 + $0x54] sm:$0xf]
  %v50 = vld [vmem:[%s1 + $0x58] sm:$0xf]
  %v51 = vld [vmem:[%s1 + $0x5c] sm:$0xf]
  %v52 = vld [vmem:[%s1 + $0x60] sm:$0xf]
  %v53 = vld [vmem:[%s1 + $0x64] sm:$0xf]
  %v54 = vld [vmem:[%s1 + $0x68] sm:$0xf]
  %v55 = vld [vmem:[%s1 + $0x6c] sm:$0xf]
  %v56 = vld [vmem:[%s1 + $0x70] sm:$0xf]
  %v57 = vld [vmem:[%s1 + $0x74] sm:$0xf]
  %v58 = vld [vmem:[%s1 + $0x78] sm:$0xf]
  %v59 = vld [vmem:[%s1 + $0x7c] sm:$0xf]
  %v60 = vld [vmem:[%s0] sm:$0xf]
  %v61 = vld [vmem:[%s0 + $0x4] sm:$0xf]
  %v62 = vld [vmem:[%s0 + $0x8] sm:$0x3]
  %v63 = vld [vmem:[%s2] sm:$0xff]
  %v64 = vld [vmem:[%s2 + $0x8] sm:$0xff]
  %v65 = vld [vmem:[%s2 + $0x10] sm:$0xff]
  %v66 = vld [vmem:[%s2 + $0x18] sm:$0xff]
  %v67 = vld [vmem:[%s2 + $0x20] sm:$0xff]
  %v68 = vld [vmem:[%s2 + $0x28] sm:$0xff]
  %v69 = vld [vmem:[%s2 + $0x30] sm:$0xff]
  %v70 = vld [vmem:[%s2 + $0x38] sm:$0xff]
  %v71 = vld [vmem:[%s2 + $0x40] sm:$0xff]
  %v72 = vld [vmem:[%s2 + $0x48] sm:$0xff]
  %v73 = vld [vmem:[%s2 + $0x50] sm:$0xff]
  %v74 = vld [vmem:[%s2 + $0x58] sm:$0xff]
  %v75 = vld [vmem:[%s2 + $0x60] sm:$0xff]
  %v76 = vld [vmem:[%s2 + $0x68] sm:$0xff]
  %v77 = vld [vmem:[%s2 + $0x70] sm:$0xff]
  %v78 = vld [vmem:[%s2 + $0x78] sm:$0xff]
  %v79 = vld [vmem:[%s2 + $0x80] sm:$0xff]
  %v80 = vld [vmem:[%s2 + $0x88] sm:$0xff]
  %v81 = vld [vmem:[%s2 + $0x90] sm:$0xff]
  %v82 = vld [vmem:[%s2 + $0x98] sm:$0xff]
  %v83 = vld [vmem:[%s2 + $0xa0] sm:$0xff]
  %v84 = vld [vmem:[%s2 + $0xa8] sm:$0xff]
  %v85 = vld [vmem:[%s2 + $0xb0] sm:$0xff]
  %v86 = vld [vmem:[%s2 + $0xb8] sm:$0xff]
  %v87 = vld [vmem:[%s2 + $0xc0] sm:$0xff]
  %v88 = vld [vmem:[%s2 + $0xc8] sm:$0xff]
  %v89 = vld [vmem:[%s2 + $0xd0] sm:$0xff]
  %v90 = vld [vmem:[%s2 + $0xd8] sm:$0xff]
  %v91 = vld [vmem:[%s2 + $0xe0] sm:$0xff]
  %v92 = vld [vmem:[%s2 + $0xe8] sm:$0xff]
  %v93 = vld [vmem:[%s2 + $0xf0] sm:$0xff]
  %v94 = vld [vmem:[%s2 + $0xf8] sm:$0xff]
  %96 = vset.pattern.permute.xlu0 0
  %97 = vperm.xlu0 %96, %v63
  %v98 = vpop.permute.xlu0 %97
  %101 = vset.pattern.permute.xlu0 0
  %102 = vperm.xlu0 %101, %v64
  %v103 = vpop.permute.xlu0 %102
  %106 = vset.pattern.permute.xlu0 0
  %107 = vperm.xlu0 %106, %v65
  %v108 = vpop.permute.xlu0 %107
  %111 = vset.pattern.permute.xlu0 0
  %112 = vperm.xlu0 %111, %v66
  %v113 = vpop.permute.xlu0 %112
  %116 = vset.pattern.permute.xlu0 0
  %117 = vperm.xlu0 %116, %v67
  %v118 = vpop.permute.xlu0 %117
  %121 = vset.pattern.permute.xlu0 0
  %122 = vperm.xlu0 %121, %v68
  %v123 = vpop.permute.xlu0 %122
  %126 = vset.pattern.permute.xlu0 0
  %127 = vperm.xlu0 %126, %v69
  %v128 = vpop.permute.xlu0 %127
  %131 = vset.pattern.permute.xlu0 0
  %132 = vperm.xlu0 %131, %v70
  %v133 = vpop.permute.xlu0 %132
  %136 = vset.pattern.permute.xlu0 0
  %137 = vperm.xlu0 %136, %v71
  %v138 = vpop.permute.xlu0 %137
  %141 = vset.pattern.permute.xlu0 0
  %142 = vperm.xlu0 %141, %v72
  %v143 = vpop.permute.xlu0 %142
  %146 = vset.pattern.permute.xlu0 0
  %147 = vperm.xlu0 %146, %v73
  %v148 = vpop.permute.xlu0 %147
  %151 = vset.pattern.permute.xlu0 0
  %152 = vperm.xlu0 %151, %v74
  %v153 = vpop.permute.xlu0 %152
  %156 = vset.pattern.permute.xlu0 0
  %157 = vperm.xlu0 %156, %v75
  %v158 = vpop.permute.xlu0 %157
  %161 = vset.pattern.permute.xlu0 0
  %162 = vperm.xlu0 %161, %v76
  %v163 = vpop.permute.xlu0 %162
  %166 = vset.pattern.permute.xlu0 0
  %167 = vperm.xlu0 %166, %v77
  %v168 = vpop.permute.xlu0 %167
  %171 = vset.pattern.permute.xlu0 0
  %172 = vperm.xlu0 %171, %v78
  %v173 = vpop.permute.xlu0 %172
  %176 = vset.pattern.permute.xlu0 0
  %177 = vperm.xlu0 %176, %v79
  %v178 = vpop.permute.xlu0 %177
  %181 = vset.pattern.permute.xlu0 0
  %182 = vperm.xlu0 %181, %v80
  %v183 = vpop.permute.xlu0 %182
  %186 = vset.pattern.permute.xlu0 0
  %187 = vperm.xlu0 %186, %v81
  %v188 = vpop.permute.xlu0 %187
  %191 = vset.pattern.permute.xlu0 0
  %192 = vperm.xlu0 %191, %v82
  %v193 = vpop.permute.xlu0 %192
  %196 = vset.pattern.permute.xlu0 0
  %197 = vperm.xlu0 %196, %v83
  %v198 = vpop.permute.xlu0 %197
  %201 = vset.pattern.permute.xlu0 0
  %202 = vperm.xlu0 %201, %v84
  %v203 = vpop.permute.xlu0 %202
  %206 = vset.pattern.permute.xlu0 0
  %207 = vperm.xlu0 %206, %v85
  %v208 = vpop.permute.xlu0 %207
  %211 = vset.pattern.permute.xlu0 0
  %212 = vperm.xlu0 %211, %v86
  %v213 = vpop.permute.xlu0 %212
  %216 = vset.pattern.permute.xlu0 0
  %217 = vperm.xlu0 %216, %v87
  %v218 = vpop.permute.xlu0 %217
  %221 = vset.pattern.permute.xlu0 0
  %222 = vperm.xlu0 %221, %v88
  %v223 = vpop.permute.xlu0 %222
  %226 = vset.pattern.permute.xlu0 0
  %227 = vperm.xlu0 %226, %v89
  %v228 = vpop.permute.xlu0 %227
  %231 = vset.pattern.permute.xlu0 0
  %232 = vperm.xlu0 %231, %v90
  %v233 = vpop.permute.xlu0 %232
  %236 = vset.pattern.permute.xlu0 0
  %237 = vperm.xlu0 %236, %v91
  %v238 = vpop.permute.xlu0 %237
  %241 = vset.pattern.permute.xlu0 0
  %242 = vperm.xlu0 %241, %v92
  %v243 = vpop.permute.xlu0 %242
  %246 = vset.pattern.permute.xlu0 0
  %247 = vperm.xlu0 %246, %v93
  %v248 = vpop.permute.xlu0 %247
  %251 = vset.pattern.permute.xlu0 0
  %252 = vperm.xlu0 %251, %v94
  %v253 = vpop.permute.xlu0 %252
  %v287 = vunpack.c.l.b16 %v28
  %v288 = vunpack.c.l.b16 %v29
  %v289 = vunpack.c.l.b16 %v30
  %v290 = vunpack.c.l.b16 %v31
  %v291 = vunpack.c.l.b16 %v32
  %v292 = vunpack.c.l.b16 %v33
  %v293 = vunpack.c.l.b16 %v34
  %v294 = vunpack.c.l.b16 %v35
  %v295 = vunpack.c.l.b16 %v36
  %v296 = vunpack.c.l.b16 %v37
  %v297 = vunpack.c.l.b16 %v38
  %v298 = vunpack.c.l.b16 %v39
  %v299 = vunpack.c.l.b16 %v40
  %v300 = vunpack.c.l.b16 %v41
  %v301 = vunpack.c.l.b16 %v42
  %v302 = vunpack.c.l.b16 %v43
  %v303 = vunpack.c.l.b16 %v44
  %v304 = vunpack.c.l.b16 %v45
  %v305 = vunpack.c.l.b16 %v46
  %v306 = vunpack.c.l.b16 %v47
  %v307 = vunpack.c.l.b16 %v48
  %v308 = vunpack.c.l.b16 %v49
  %v309 = vunpack.c.l.b16 %v50
  %v310 = vunpack.c.l.b16 %v51
  %v311 = vunpack.c.l.b16 %v52
  %v312 = vunpack.c.l.b16 %v53
  %v313 = vunpack.c.l.b16 %v54
  %v314 = vunpack.c.l.b16 %v55
  %v315 = vunpack.c.l.b16 %v56
  %v316 = vunpack.c.l.b16 %v57
  %v317 = vunpack.c.l.b16 %v58
  %v318 = vunpack.c.l.b16 %v59
  %v319 = vpack.c.b16 %v288, %v287
  %v320 = vpack.c.b16 %v290, %v289
  %v321 = vpack.c.b16 %v292, %v291
  %v322 = vpack.c.b16 %v294, %v293
  %v323 = vpack.c.b16 %v296, %v295
  %v324 = vpack.c.b16 %v298, %v297
  %v325 = vpack.c.b16 %v300, %v299
  %v326 = vpack.c.b16 %v302, %v301
  %v327 = vpack.c.b16 %v304, %v303
  %v328 = vpack.c.b16 %v306, %v305
  %v329 = vpack.c.b16 %v308, %v307
  %v330 = vpack.c.b16 %v310, %v309
  %v331 = vpack.c.b16 %v312, %v311
  %v332 = vpack.c.b16 %v314, %v313
  %v333 = vpack.c.b16 %v316, %v315
  %v334 = vpack.c.b16 %v318, %v317
  %v338 = vunpack.c.l.b16 %v60
  %v339 = vunpack.c.l.b16 %v61
  %v340 = vunpack.c.l.b16 %v62
  %v341 = vpack.c.b16 %v339, %v338
  %v342 = vpack.c.b16 %v340, %v340
  %vm344 = vcmask 162816
  %v346 = vsel %vm344, %v319, 0
  %v349 = vsel %vm344, %v320, 0
  %v352 = vsel %vm344, %v321, 0
  %v355 = vsel %vm344, %v322, 0
  %v358 = vsel %vm344, %v323, 0
  %v361 = vsel %vm344, %v324, 0
  %v364 = vsel %vm344, %v325, 0
  %v367 = vsel %vm344, %v326, 0
  %v370 = vsel %vm344, %v327, 0
  %v373 = vsel %vm344, %v328, 0
  %v376 = vsel %vm344, %v329, 0
  %v379 = vsel %vm344, %v330, 0
  %v382 = vsel %vm344, %v331, 0
  %v385 = vsel %vm344, %v332, 0
  %v388 = vsel %vm344, %v333, 0
  %v391 = vsel %vm344, %v334, 0
  %vm393 = vcmask 1041408
  %v395 = vsel %vm393, %v342, 0
  %397 = vmatpush.bf16.msra.mxu0 0
  %398 = vmatpush.bf16.msra.mxu0 0
  %399 = vmatpush.bf16.msra.mxu0 0
  %400 = vmatpush.bf16.msra.mxu0 0
  %401 = vmatpush.bf16.msra.mxu0 0
  %402 = vmatpush.bf16.msra.mxu0 0
  %403 = vmatpush.bf16.msra.mxu0 %v395
  %404 = vmatpush.bf16.msra.mxu0 %v341
  %405 = vmatmul.bf16.gmra.mxu0 %v346
  %v406 = vpop.f32.mrf.mxu0
  %v407 = vadd.f32 %v98, %v406
  %v408 = vpop.f32.mrf.mxu0
  %v409 = vadd.f32 %v103, %v408
  %410 = vmatmul.bf16.gmra.mxu0 %v349
  %v411 = vpop.f32.mrf.mxu0
  %v412 = vadd.f32 %v108, %v411
  %v413 = vpop.f32.mrf.mxu0
  %v414 = vadd.f32 %v113, %v413
  %415 = vmatmul.bf16.gmra.mxu0 %v352
  %v416 = vpop.f32.mrf.mxu0
  %v417 = vadd.f32 %v118, %v416
  %v418 = vpop.f32.mrf.mxu0
  %v419 = vadd.f32 %v123, %v418
  %420 = vmatmul.bf16.gmra.mxu0 %v355
  %v421 = vpop.f32.mrf.mxu0
  %v422 = vadd.f32 %v128, %v421
  %v423 = vpop.f32.mrf.mxu0
  %v424 = vadd.f32 %v133, %v423
  %425 = vmatmul.bf16.gmra.mxu0 %v358
  %v426 = vpop.f32.mrf.mxu0
  %v427 = vadd.f32 %v138, %v426
  %v428 = vpop.f32.mrf.mxu0
  %v429 = vadd.f32 %v143, %v428
  %430 = vmatmul.bf16.gmra.mxu0 %v361
  %v431 = vpop.f32.mrf.mxu0
  %v432 = vadd.f32 %v148, %v431
  %v433 = vpop.f32.mrf.mxu0
  %v434 = vadd.f32 %v153, %v433
  %435 = vmatmul.bf16.gmra.mxu0 %v364
  %v436 = vpop.f32.mrf.mxu0
  %v437 = vadd.f32 %v158, %v436
  %v438 = vpop.f32.mrf.mxu0
  %v439 = vadd.f32 %v163, %v438
  %440 = vmatmul.bf16.gmra.mxu0 %v367
  %v441 = vpop.f32.mrf.mxu0
  %v442 = vadd.f32 %v168, %v441
  %v443 = vpop.f32.mrf.mxu0
  %v444 = vadd.f32 %v173, %v443
  %445 = vmatmul.bf16.gmra.mxu0 %v370
  %v446 = vpop.f32.mrf.mxu0
  %v447 = vadd.f32 %v178, %v446
  %v448 = vpop.f32.mrf.mxu0
  %v449 = vadd.f32 %v183, %v448
  %450 = vmatmul.bf16.gmra.mxu0 %v373
  %v451 = vpop.f32.mrf.mxu0
  %v452 = vadd.f32 %v188, %v451
  %v453 = vpop.f32.mrf.mxu0
  %v454 = vadd.f32 %v193, %v453
  %455 = vmatmul.bf16.gmra.mxu0 %v376
  %v456 = vpop.f32.mrf.mxu0
  %v457 = vadd.f32 %v198, %v456
  %v458 = vpop.f32.mrf.mxu0
  %v459 = vadd.f32 %v203, %v458
  %460 = vmatmul.bf16.gmra.mxu0 %v379
  %v461 = vpop.f32.mrf.mxu0
  %v462 = vadd.f32 %v208, %v461
  %v463 = vpop.f32.mrf.mxu0
  %v464 = vadd.f32 %v213, %v463
  %465 = vmatmul.bf16.gmra.mxu0 %v382
  %v466 = vpop.f32.mrf.mxu0
  %v467 = vadd.f32 %v218, %v466
  %v468 = vpop.f32.mrf.mxu0
  %v469 = vadd.f32 %v223, %v468
  %470 = vmatmul.bf16.gmra.mxu0 %v385
  %v471 = vpop.f32.mrf.mxu0
  %v472 = vadd.f32 %v228, %v471
  %v473 = vpop.f32.mrf.mxu0
  %v474 = vadd.f32 %v233, %v473
  %475 = vmatmul.bf16.gmra.mxu0 %v388
  %v476 = vpop.f32.mrf.mxu0
  %v477 = vadd.f32 %v238, %v476
  %v478 = vpop.f32.mrf.mxu0
  %v479 = vadd.f32 %v243, %v478
  %480 = vmatmul.bf16.gmra.mxu0 %v391
  %v481 = vpop.f32.mrf.mxu0
  %v482 = vadd.f32 %v248, %v481
  %v483 = vpop.f32.mrf.mxu0
  %v484 = vadd.f32 %v253, %v483
  %485 = vdwg.mxu0
  %v486 = vmax.f32 %v407, 0.0
  %v487 = vmax.f32 %v409, 0.0
  %v488 = vmax.f32 %v412, 0.0
  %v489 = vmax.f32 %v414, 0.0
  %v490 = vmax.f32 %v417, 0.0
  %v491 = vmax.f32 %v419, 0.0
  %v492 = vmax.f32 %v422, 0.0
  %v493 = vmax.f32 %v424, 0.0
  %v494 = vmax.f32 %v427, 0.0
  %v495 = vmax.f32 %v429, 0.0
  %v496 = vmax.f32 %v432, 0.0
  %v497 = vmax.f32 %v434, 0.0
  %v498 = vmax.f32 %v437, 0.0
  %v499 = vmax.f32 %v439, 0.0
  %v500 = vmax.f32 %v442, 0.0
  %v501 = vmax.f32 %v444, 0.0
  %v502 = vmax.f32 %v447, 0.0
  %v503 = vmax.f32 %v449, 0.0
  %v504 = vmax.f32 %v452, 0.0
  %v505 = vmax.f32 %v454, 0.0
  %v506 = vmax.f32 %v457, 0.0
  %v507 = vmax.f32 %v459, 0.0
  %v508 = vmax.f32 %v462, 0.0
  %v509 = vmax.f32 %v464, 0.0
  %v510 = vmax.f32 %v467, 0.0
  %v511 = vmax.f32 %v469, 0.0
  %v512 = vmax.f32 %v472, 0.0
  %v513 = vmax.f32 %v474, 0.0
  %v514 = vmax.f32 %v477, 0.0
  %v515 = vmax.f32 %v479, 0.0
  %v516 = vmax.f32 %v482, 0.0
  %v517 = vmax.f32 %v484, 0.0
  %v518 = vpack.c.bf16 %v487, %v486
  %v519 = vpack.c.bf16 %v489, %v488
  %v520 = vpack.c.bf16 %v491, %v490
  %v521 = vpack.c.bf16 %v493, %v492
  %v522 = vpack.c.bf16 %v495, %v494
  %v523 = vpack.c.bf16 %v497, %v496
  %v524 = vpack.c.bf16 %v499, %v498
  %v525 = vpack.c.bf16 %v501, %v500
  %v526 = vpack.c.bf16 %v503, %v502
  %v527 = vpack.c.bf16 %v505, %v504
  %v528 = vpack.c.bf16 %v507, %v506
  %v529 = vpack.c.bf16 %v509, %v508
  %v530 = vpack.c.bf16 %v511, %v510
  %v531 = vpack.c.bf16 %v513, %v512
  %v532 = vpack.c.bf16 %v515, %v514
  %v533 = vpack.c.bf16 %v517, %v516
  %v534 = vld [vmem:[%s3] sm:$0xff]
  %v535 = vld [vmem:[%s3 + $0x8] sm:$0xff]
  %v536 = vld [vmem:[%s3 + $0x10] sm:$0xff]
  %v537 = vld [vmem:[%s3 + $0x18] sm:$0xff]
  %v538 = vld [vmem:[%s3 + $0x20] sm:$0xff]
  %v539 = vld [vmem:[%s3 + $0x28] sm:$0xff]
  %v540 = vld [vmem:[%s3 + $0x30] sm:$0xff]
  %v541 = vld [vmem:[%s3 + $0x38] sm:$0xff]
  %v542 = vld [vmem:[%s3 + $0x40] sm:$0xff]
  %v543 = vld [vmem:[%s3 + $0x48] sm:$0xff]
  %v544 = vld [vmem:[%s3 + $0x50] sm:$0xff]
  %v545 = vld [vmem:[%s3 + $0x58] sm:$0xff]
  %v546 = vld [vmem:[%s3 + $0x60] sm:$0xff]
  %v547 = vld [vmem:[%s3 + $0x68] sm:$0xff]
  %v548 = vld [vmem:[%s3 + $0x70] sm:$0xff]
  %v549 = vld [vmem:[%s3 + $0x78] sm:$0xff]
  %v550 = vld [vmem:[%s3 + $0x80] sm:$0xff]
  %v551 = vld [vmem:[%s3 + $0x88] sm:$0xff]
  %v552 = vld [vmem:[%s3 + $0x90] sm:$0xff]
  %v553 = vld [vmem:[%s3 + $0x98] sm:$0xff]
  %v554 = vld [vmem:[%s3 + $0xa0] sm:$0xff]
  %v555 = vld [vmem:[%s3 + $0xa8] sm:$0xff]
  %v556 = vld [vmem:[%s3 + $0xb0] sm:$0xff]
  %v557 = vld [vmem:[%s3 + $0xb8] sm:$0xff]
  %v558 = vld [vmem:[%s3 + $0xc0] sm:$0xff]
  %v559 = vld [vmem:[%s3 + $0xc8] sm:$0xff]
  %v560 = vld [vmem:[%s3 + $0xd0] sm:$0xff]
  %v561 = vld [vmem:[%s3 + $0xd8] sm:$0xff]
  %v562 = vld [vmem:[%s3 + $0xe0] sm:$0xff]
  %v563 = vld [vmem:[%s3 + $0xe8] sm:$0xff]
  %v564 = vld [vmem:[%s3 + $0xf0] sm:$0xff]
  %v565 = vld [vmem:[%s3 + $0xf8] sm:$0xff]
  %v566 = vld [vmem:[%s4] sm:$0xff]
  %v567 = vld [vmem:[%s4 + $0x8] sm:$0xff]
  %v568 = vld [vmem:[%s4 + $0x10] sm:$0xff]
  %v569 = vld [vmem:[%s4 + $0x18] sm:$0xff]
  %v570 = vld [vmem:[%s4 + $0x20] sm:$0xff]
  %v571 = vld [vmem:[%s4 + $0x28] sm:$0xff]
  %v572 = vld [vmem:[%s4 + $0x30] sm:$0xff]
  %v573 = vld [vmem:[%s4 + $0x38] sm:$0xff]
  %v574 = vld [vmem:[%s4 + $0x40] sm:$0xff]
  %v575 = vld [vmem:[%s4 + $0x48] sm:$0xff]
  %v576 = vld [vmem:[%s4 + $0x50] sm:$0xff]
  %v577 = vld [vmem:[%s4 + $0x58] sm:$0xff]
  %v578 = vld [vmem:[%s4 + $0x60] sm:$0xff]
  %v579 = vld [vmem:[%s4 + $0x68] sm:$0xff]
  %v580 = vld [vmem:[%s4 + $0x70] sm:$0xff]
  %v581 = vld [vmem:[%s4 + $0x78] sm:$0xff]
  %v582 = vld [vmem:[%s4 + $0x80] sm:$0xff]
  %v583 = vld [vmem:[%s4 + $0x88] sm:$0xff]
  %v584 = vld [vmem:[%s4 + $0x90] sm:$0xff]
  %v585 = vld [vmem:[%s4 + $0x98] sm:$0xff]
  %v586 = vld [vmem:[%s4 + $0xa0] sm:$0xff]
  %v587 = vld [vmem:[%s4 + $0xa8] sm:$0xff]
  %v588 = vld [vmem:[%s4 + $0xb0] sm:$0xff]
  %v589 = vld [vmem:[%s4 + $0xb8] sm:$0xff]
  %v590 = vld [vmem:[%s4 + $0xc0] sm:$0xff]
  %v591 = vld [vmem:[%s4 + $0xc8] sm:$0xff]
  %v592 = vld [vmem:[%s4 + $0xd0] sm:$0xff]
  %v593 = vld [vmem:[%s4 + $0xd8] sm:$0xff]
  %v594 = vld [vmem:[%s4 + $0xe0] sm:$0xff]
  %v595 = vld [vmem:[%s4 + $0xe8] sm:$0xff]
  %v596 = vld [vmem:[%s4 + $0xf0] sm:$0xff]
  %v597 = vld [vmem:[%s4 + $0xf8] sm:$0xff]
  %599 = vset.pattern.permute.xlu0 0
  %600 = vperm.xlu0 %599, %v566
  %v601 = vpop.permute.xlu0 %600
  %604 = vset.pattern.permute.xlu0 0
  %605 = vperm.xlu0 %604, %v567
  %v606 = vpop.permute.xlu0 %605
  %609 = vset.pattern.permute.xlu0 0
  %610 = vperm.xlu0 %609, %v568
  %v611 = vpop.permute.xlu0 %610
  %614 = vset.pattern.permute.xlu0 0
  %615 = vperm.xlu0 %614, %v569
  %v616 = vpop.permute.xlu0 %615
  %619 = vset.pattern.permute.xlu0 0
  %620 = vperm.xlu0 %619, %v570
  %v621 = vpop.permute.xlu0 %620
  %624 = vset.pattern.permute.xlu0 0
  %625 = vperm.xlu0 %624, %v571
  %v626 = vpop.permute.xlu0 %625
  %629 = vset.pattern.permute.xlu0 0
  %630 = vperm.xlu0 %629, %v572
  %v631 = vpop.permute.xlu0 %630
  %634 = vset.pattern.permute.xlu0 0
  %635 = vperm.xlu0 %634, %v573
  %v636 = vpop.permute.xlu0 %635
  %639 = vset.pattern.permute.xlu0 0
  %640 = vperm.xlu0 %639, %v574
  %v641 = vpop.permute.xlu0 %640
  %644 = vset.pattern.permute.xlu0 0
  %645 = vperm.xlu0 %644, %v575
  %v646 = vpop.permute.xlu0 %645
  %649 = vset.pattern.permute.xlu0 0
  %650 = vperm.xlu0 %649, %v576
  %v651 = vpop.permute.xlu0 %650
  %654 = vset.pattern.permute.xlu0 0
  %655 = vperm.xlu0 %654, %v577
  %v656 = vpop.permute.xlu0 %655
  %659 = vset.pattern.permute.xlu0 0
  %660 = vperm.xlu0 %659, %v578
  %v661 = vpop.permute.xlu0 %660
  %664 = vset.pattern.permute.xlu0 0
  %665 = vperm.xlu0 %664, %v579
  %v666 = vpop.permute.xlu0 %665
  %669 = vset.pattern.permute.xlu0 0
  %670 = vperm.xlu0 %669, %v580
  %v671 = vpop.permute.xlu0 %670
  %674 = vset.pattern.permute.xlu0 0
  %675 = vperm.xlu0 %674, %v581
  %v676 = vpop.permute.xlu0 %675
  %679 = vset.pattern.permute.xlu0 0
  %680 = vperm.xlu0 %679, %v582
  %v681 = vpop.permute.xlu0 %680
  %684 = vset.pattern.permute.xlu0 0
  %685 = vperm.xlu0 %684, %v583
  %v686 = vpop.permute.xlu0 %685
  %689 = vset.pattern.permute.xlu0 0
  %690 = vperm.xlu0 %689, %v584
  %v691 = vpop.permute.xlu0 %690
  %694 = vset.pattern.permute.xlu0 0
  %695 = vperm.xlu0 %694, %v585
  %v696 = vpop.permute.xlu0 %695
  %699 = vset.pattern.permute.xlu0 0
  %700 = vperm.xlu0 %699, %v586
  %v701 = vpop.permute.xlu0 %700
  %704 = vset.pattern.permute.xlu0 0
  %705 = vperm.xlu0 %704, %v587
  %v706 = vpop.permute.xlu0 %705
  %709 = vset.pattern.permute.xlu0 0
  %710 = vperm.xlu0 %709, %v588
  %v711 = vpop.permute.xlu0 %710
  %714 = vset.pattern.permute.xlu0 0
  %715 = vperm.xlu0 %714, %v589
  %v716 = vpop.permute.xlu0 %715
  %719 = vset.pattern.permute.xlu0 0
  %720 = vperm.xlu0 %719, %v590
  %v721 = vpop.permute.xlu0 %720
  %724 = vset.pattern.permute.xlu0 0
  %725 = vperm.xlu0 %724, %v591
  %v726 = vpop.permute.xlu0 %725
  %729 = vset.pattern.permute.xlu0 0
  %730 = vperm.xlu0 %729, %v592
  %v731 = vpop.permute.xlu0 %730
  %734 = vset.pattern.permute.xlu0 0
  %735 = vperm.xlu0 %734, %v593
  %v736 = vpop.permute.xlu0 %735
  %739 = vset.pattern.permute.xlu0 0
  %740 = vperm.xlu0 %739, %v594
  %v741 = vpop.permute.xlu0 %740
  %744 = vset.pattern.permute.xlu0 0
  %745 = vperm.xlu0 %744, %v595
  %v746 = vpop.permute.xlu0 %745
  %749 = vset.pattern.permute.xlu0 0
  %750 = vperm.xlu0 %749, %v596
  %v751 = vpop.permute.xlu0 %750
  %754 = vset.pattern.permute.xlu0 0
  %755 = vperm.xlu0 %754, %v597
  %v756 = vpop.permute.xlu0 %755
  %v790 = vunpack.c.l.b16 %v534
  %v791 = vunpack.c.h.b16 %v534
  %v792 = vunpack.c.l.b16 %v535
  %v793 = vunpack.c.h.b16 %v535
  %v794 = vunpack.c.l.b16 %v536
  %v795 = vunpack.c.h.b16 %v536
  %v796 = vunpack.c.l.b16 %v537
  %v797 = vunpack.c.h.b16 %v537
  %v798 = vunpack.c.l.b16 %v538
  %v799 = vunpack.c.h.b16 %v538
  %v800 = vunpack.c.l.b16 %v539
  %v801 = vunpack.c.h.b16 %v539
  %v802 = vunpack.c.l.b16 %v540
  %v803 = vunpack.c.h.b16 %v540
  %v804 = vunpack.c.l.b16 %v541
  %v805 = vunpack.c.h.b16 %v541
  %v806 = vunpack.c.l.b16 %v542
  %v807 = vunpack.c.h.b16 %v542
  %v808 = vunpack.c.l.b16 %v543
  %v809 = vunpack.c.h.b16 %v543
  %v810 = vunpack.c.l.b16 %v544
  %v811 = vunpack.c.h.b16 %v544
  %v812 = vunpack.c.l.b16 %v545
  %v813 = vunpack.c.h.b16 %v545
  %v814 = vunpack.c.l.b16 %v546
  %v815 = vunpack.c.h.b16 %v546
  %v816 = vunpack.c.l.b16 %v547
  %v817 = vunpack.c.h.b16 %v547
  %v818 = vunpack.c.l.b16 %v548
  %v819 = vunpack.c.h.b16 %v548
  %v820 = vunpack.c.l.b16 %v549
  %v821 = vunpack.c.h.b16 %v549
  %v822 = vunpack.c.l.b16 %v550
  %v823 = vunpack.c.h.b16 %v550
  %v824 = vunpack.c.l.b16 %v551
  %v825 = vunpack.c.h.b16 %v551
  %v826 = vunpack.c.l.b16 %v552
  %v827 = vunpack.c.h.b16 %v552
  %v828 = vunpack.c.l.b16 %v553
  %v829 = vunpack.c.h.b16 %v553
  %v830 = vunpack.c.l.b16 %v554
  %v831 = vunpack.c.h.b16 %v554
  %v832 = vunpack.c.l.b16 %v555
  %v833 = vunpack.c.h.b16 %v555
  %v834 = vunpack.c.l.b16 %v556
  %v835 = vunpack.c.h.b16 %v556
  %v836 = vunpack.c.l.b16 %v557
  %v837 = vunpack.c.h.b16 %v557
  %v838 = vunpack.c.l.b16 %v558
  %v839 = vunpack.c.h.b16 %v558
  %v840 = vunpack.c.l.b16 %v559
  %v841 = vunpack.c.h.b16 %v559
  %v842 = vunpack.c.l.b16 %v560
  %v843 = vunpack.c.h.b16 %v560
  %v844 = vunpack.c.l.b16 %v561
  %v845 = vunpack.c.h.b16 %v561
  %v846 = vunpack.c.l.b16 %v562
  %v847 = vunpack.c.h.b16 %v562
  %v848 = vunpack.c.l.b16 %v563
  %v849 = vunpack.c.h.b16 %v563
  %v850 = vunpack.c.l.b16 %v564
  %v851 = vunpack.c.h.b16 %v564
  %v852 = vunpack.c.l.b16 %v565
  %v853 = vunpack.c.h.b16 %v565
  %v854 = vpack.c.b16 %v792, %v790
  %v855 = vpack.c.b16 %v793, %v791
  %v856 = vpack.c.b16 %v796, %v794
  %v857 = vpack.c.b16 %v797, %v795
  %v858 = vpack.c.b16 %v800, %v798
  %v859 = vpack.c.b16 %v801, %v799
  %v860 = vpack.c.b16 %v804, %v802
  %v861 = vpack.c.b16 %v805, %v803
  %v862 = vpack.c.b16 %v808, %v806
  %v863 = vpack.c.b16 %v809, %v807
  %v864 = vpack.c.b16 %v812, %v810
  %v865 = vpack.c.b16 %v813, %v811
  %v866 = vpack.c.b16 %v816, %v814
  %v867 = vpack.c.b16 %v817, %v815
  %v868 = vpack.c.b16 %v820, %v818
  %v869 = vpack.c.b16 %v821, %v819
  %v870 = vpack.c.b16 %v824, %v822
  %v871 = vpack.c.b16 %v825, %v823
  %v872 = vpack.c.b16 %v828, %v826
  %v873 = vpack.c.b16 %v829, %v827
  %v874 = vpack.c.b16 %v832, %v830
  %v875 = vpack.c.b16 %v833, %v831
  %v876 = vpack.c.b16 %v836, %v834
  %v877 = vpack.c.b16 %v837, %v835
  %v878 = vpack.c.b16 %v840, %v838
  %v879 = vpack.c.b16 %v841, %v839
  %v880 = vpack.c.b16 %v844, %v842
  %v881 = vpack.c.b16 %v845, %v843
  %v882 = vpack.c.b16 %v848, %v846
  %v883 = vpack.c.b16 %v849, %v847
  %v884 = vpack.c.b16 %v852, %v850
  %v885 = vpack.c.b16 %v853, %v851
  %918 = vmatpush.bf16.msra.mxu0 %v525
  %919 = vmatpush.bf16.msra.mxu0 %v524
  %920 = vmatpush.bf16.msra.mxu0 %v523
  %921 = vmatpush.bf16.msra.mxu0 %v522
  %922 = vmatpush.bf16.msra.mxu0 %v521
  %923 = vmatpush.bf16.msra.mxu0 %v520
  %924 = vmatpush.bf16.msra.mxu0 %v519
  %925 = vmatpush.bf16.msra.mxu0 %v518
  %926 = vmatmul.bf16.gmra.mxu0 %v854
  %v927 = vpop.f32.mrf.mxu0
  %v928 = vadd.f32 %v601, %v927
  %v929 = vpop.f32.mrf.mxu0
  %v930 = vadd.f32 %v606, %v929
  %931 = vmatmul.bf16.gmra.mxu0 %v856
  %v932 = vpop.f32.mrf.mxu0
  %v933 = vadd.f32 %v611, %v932
  %v934 = vpop.f32.mrf.mxu0
  %v935 = vadd.f32 %v616, %v934
  %936 = vmatmul.bf16.gmra.mxu0 %v858
  %v937 = vpop.f32.mrf.mxu0
  %v938 = vadd.f32 %v621, %v937
  %v939 = vpop.f32.mrf.mxu0
  %v940 = vadd.f32 %v626, %v939
  %941 = vmatmul.bf16.gmra.mxu0 %v860
  %v942 = vpop.f32.mrf.mxu0
  %v943 = vadd.f32 %v631, %v942
  %v944 = vpop.f32.mrf.mxu0
  %v945 = vadd.f32 %v636, %v944
  %946 = vmatmul.bf16.gmra.mxu0 %v862
  %v947 = vpop.f32.mrf.mxu0
  %v948 = vadd.f32 %v641, %v947
  %v949 = vpop.f32.mrf.mxu0
  %v950 = vadd.f32 %v646, %v949
  %951 = vmatmul.bf16.gmra.mxu0 %v864
  %v952 = vpop.f32.mrf.mxu0
  %v953 = vadd.f32 %v651, %v952
  %v954 = vpop.f32.mrf.mxu0
  %v955 = vadd.f32 %v656, %v954
  %956 = vmatmul.bf16.gmra.mxu0 %v866
  %v957 = vpop.f32.mrf.mxu0
  %v958 = vadd.f32 %v661, %v957
  %v959 = vpop.f32.mrf.mxu0
  %v960 = vadd.f32 %v666, %v959
  %961 = vmatmul.bf16.gmra.mxu0 %v868
  %v962 = vpop.f32.mrf.mxu0
  %v963 = vadd.f32 %v671, %v962
  %v964 = vpop.f32.mrf.mxu0
  %v965 = vadd.f32 %v676, %v964
  %966 = vmatmul.bf16.gmra.mxu0 %v870
  %v967 = vpop.f32.mrf.mxu0
  %v968 = vadd.f32 %v681, %v967
  %v969 = vpop.f32.mrf.mxu0
  %v970 = vadd.f32 %v686, %v969
  %971 = vmatmul.bf16.gmra.mxu0 %v872
  %v972 = vpop.f32.mrf.mxu0
  %v973 = vadd.f32 %v691, %v972
  %v974 = vpop.f32.mrf.mxu0
  %v975 = vadd.f32 %v696, %v974
  %976 = vmatmul.bf16.gmra.mxu0 %v874
  %v977 = vpop.f32.mrf.mxu0
  %v978 = vadd.f32 %v701, %v977
  %v979 = vpop.f32.mrf.mxu0
  %v980 = vadd.f32 %v706, %v979
  %981 = vmatmul.bf16.gmra.mxu0 %v876
  %v982 = vpop.f32.mrf.mxu0
  %v983 = vadd.f32 %v711, %v982
  %v984 = vpop.f32.mrf.mxu0
  %v985 = vadd.f32 %v716, %v984
  %986 = vmatmul.bf16.gmra.mxu0 %v878
  %v987 = vpop.f32.mrf.mxu0
  %v988 = vadd.f32 %v721, %v987
  %v989 = vpop.f32.mrf.mxu0
  %v990 = vadd.f32 %v726, %v989
  %991 = vmatmul.bf16.gmra.mxu0 %v880
  %v992 = vpop.f32.mrf.mxu0
  %v993 = vadd.f32 %v731, %v992
  %v994 = vpop.f32.mrf.mxu0
  %v995 = vadd.f32 %v736, %v994
  %996 = vmatmul.bf16.gmra.mxu0 %v882
  %v997 = vpop.f32.mrf.mxu0
  %v998 = vadd.f32 %v741, %v997
  %v999 = vpop.f32.mrf.mxu0
  %v1000 = vadd.f32 %v746, %v999
  %1001 = vmatmul.bf16.gmra.mxu0 %v884
  %v1002 = vpop.f32.mrf.mxu0
  %v1003 = vadd.f32 %v751, %v1002
  %v1004 = vpop.f32.mrf.mxu0
  %v1005 = vadd.f32 %v756, %v1004
  %1006 = vdwg.mxu0
  %1007 = vmatpush.bf16.msra.mxu0 %v533
  %1008 = vmatpush.bf16.msra.mxu0 %v532
  %1009 = vmatpush.bf16.msra.mxu0 %v531
  %1010 = vmatpush.bf16.msra.mxu0 %v530
  %1011 = vmatpush.bf16.msra.mxu0 %v529
  %1012 = vmatpush.bf16.msra.mxu0 %v528
  %1013 = vmatpush.bf16.msra.mxu0 %v527
  %1014 = vmatpush.bf16.msra.mxu0 %v526
  %1015 = vmatmul.bf16.gmra.mxu0 %v855
  %v1016 = vpop.f32.mrf.mxu0
  %v1017 = vadd.f32 %v928, %v1016
  %v1018 = vpop.f32.mrf.mxu0
  %v1019 = vadd.f32 %v930, %v1018
  %1020 = vmatmul.bf16.gmra.mxu0 %v857
  %v1021 = vpop.f32.mrf.mxu0
  %v1022 = vadd.f32 %v933, %v1021
  %v1023 = vpop.f32.mrf.mxu0
  %v1024 = vadd.f32 %v935, %v1023
  %1025 = vmatmul.bf16.gmra.mxu0 %v859
  %v1026 = vpop.f32.mrf.mxu0
  %v1027 = vadd.f32 %v938, %v1026
  %v1028 = vpop.f32.mrf.mxu0
  %v1029 = vadd.f32 %v940, %v1028
  %1030 = vmatmul.bf16.gmra.mxu0 %v861
  %v1031 = vpop.f32.mrf.mxu0
  %v1032 = vadd.f32 %v943, %v1031
  %v1033 = vpop.f32.mrf.mxu0
  %v1034 = vadd.f32 %v945, %v1033
  %1035 = vmatmul.bf16.gmra.mxu0 %v863
  %v1036 = vpop.f32.mrf.mxu0
  %v1037 = vadd.f32 %v948, %v1036
  %v1038 = vpop.f32.mrf.mxu0
  %v1039 = vadd.f32 %v950, %v1038
  %1040 = vmatmul.bf16.gmra.mxu0 %v865
  %v1041 = vpop.f32.mrf.mxu0
  %v1042 = vadd.f32 %v953, %v1041
  %v1043 = vpop.f32.mrf.mxu0
  %v1044 = vadd.f32 %v955, %v1043
  %1045 = vmatmul.bf16.gmra.mxu0 %v867
  %v1046 = vpop.f32.mrf.mxu0
  %v1047 = vadd.f32 %v958, %v1046
  %v1048 = vpop.f32.mrf.mxu0
  %v1049 = vadd.f32 %v960, %v1048
  %1050 = vmatmul.bf16.gmra.mxu0 %v869
  %v1051 = vpop.f32.mrf.mxu0
  %v1052 = vadd.f32 %v963, %v1051
  %v1053 = vpop.f32.mrf.mxu0
  %v1054 = vadd.f32 %v965, %v1053
  %1055 = vmatmul.bf16.gmra.mxu0 %v871
  %v1056 = vpop.f32.mrf.mxu0
  %v1057 = vadd.f32 %v968, %v1056
  %v1058 = vpop.f32.mrf.mxu0
  %v1059 = vadd.f32 %v970, %v1058
  %1060 = vmatmul.bf16.gmra.mxu0 %v873
  %v1061 = vpop.f32.mrf.mxu0
  %v1062 = vadd.f32 %v973, %v1061
  %v1063 = vpop.f32.mrf.mxu0
  %v1064 = vadd.f32 %v975, %v1063
  %1065 = vmatmul.bf16.gmra.mxu0 %v875
  %v1066 = vpop.f32.mrf.mxu0
  %v1067 = vadd.f32 %v978, %v1066
  %v1068 = vpop.f32.mrf.mxu0
  %v1069 = vadd.f32 %v980, %v1068
  %1070 = vmatmul.bf16.gmra.mxu0 %v877
  %v1071 = vpop.f32.mrf.mxu0
  %v1072 = vadd.f32 %v983, %v1071
  %v1073 = vpop.f32.mrf.mxu0
  %v1074 = vadd.f32 %v985, %v1073
  %1075 = vmatmul.bf16.gmra.mxu0 %v879
  %v1076 = vpop.f32.mrf.mxu0
  %v1077 = vadd.f32 %v988, %v1076
  %v1078 = vpop.f32.mrf.mxu0
  %v1079 = vadd.f32 %v990, %v1078
  %1080 = vmatmul.bf16.gmra.mxu0 %v881
  %v1081 = vpop.f32.mrf.mxu0
  %v1082 = vadd.f32 %v993, %v1081
  %v1083 = vpop.f32.mrf.mxu0
  %v1084 = vadd.f32 %v995, %v1083
  %1085 = vmatmul.bf16.gmra.mxu0 %v883
  %v1086 = vpop.f32.mrf.mxu0
  %v1087 = vadd.f32 %v998, %v1086
  %v1088 = vpop.f32.mrf.mxu0
  %v1089 = vadd.f32 %v1000, %v1088
  %1090 = vmatmul.bf16.gmra.mxu0 %v885
  %v1091 = vpop.f32.mrf.mxu0
  %v1092 = vadd.f32 %v1003, %v1091
  %v1093 = vpop.f32.mrf.mxu0
  %v1094 = vadd.f32 %v1005, %v1093
  %1095 = vdwg.mxu0
  %v1096 = vmax.f32 %v1017, 0.0
  %v1097 = vmax.f32 %v1019, 0.0
  %v1098 = vmax.f32 %v1022, 0.0
  %v1099 = vmax.f32 %v1024, 0.0
  %v1100 = vmax.f32 %v1027, 0.0
  %v1101 = vmax.f32 %v1029, 0.0
  %v1102 = vmax.f32 %v1032, 0.0
  %v1103 = vmax.f32 %v1034, 0.0
  %v1104 = vmax.f32 %v1037, 0.0
  %v1105 = vmax.f32 %v1039, 0.0
  %v1106 = vmax.f32 %v1042, 0.0
  %v1107 = vmax.f32 %v1044, 0.0
  %v1108 = vmax.f32 %v1047, 0.0
  %v1109 = vmax.f32 %v1049, 0.0
  %v1110 = vmax.f32 %v1052, 0.0
  %v1111 = vmax.f32 %v1054, 0.0
  %v1112 = vmax.f32 %v1057, 0.0
  %v1113 = vmax.f32 %v1059, 0.0
  %v1114 = vmax.f32 %v1062, 0.0
  %v1115 = vmax.f32 %v1064, 0.0
  %v1116 = vmax.f32 %v1067, 0.0
  %v1117 = vmax.f32 %v1069, 0.0
  %v1118 = vmax.f32 %v1072, 0.0
  %v1119 = vmax.f32 %v1074, 0.0
  %v1120 = vmax.f32 %v1077, 0.0
  %v1121 = vmax.f32 %v1079, 0.0
  %v1122 = vmax.f32 %v1082, 0.0
  %v1123 = vmax.f32 %v1084, 0.0
  %v1124 = vmax.f32 %v1087, 0.0
  %v1125 = vmax.f32 %v1089, 0.0
  %v1126 = vmax.f32 %v1092, 0.0
  %v1127 = vmax.f32 %v1094, 0.0
  %v1128 = vld [vmem:[%s5] sm:$0x3]
  %s1129 = sld [smem:[#allocation2]]
  %v1130 = vstv %s1129
  %v1132 = vperm.slane %v1128, 0
  %v1133 = vperm.slane %v1128, 1
  %1136 = vmatpush.msra.mxu0 %v1111
  %1137 = vmatpush.msra.mxu0 %v1110
  %1138 = vmatpush.msra.mxu0 %v1109
  %1139 = vmatpush.msra.mxu0 %v1108
  %1140 = vmatpush.msra.mxu0 %v1107
  %1141 = vmatpush.msra.mxu0 %v1106
  %1142 = vmatpush.msra.mxu0 %v1105
  %1143 = vmatpush.msra.mxu0 %v1104
  %1144 = vmatpush.msra.mxu0 %v1103
  %1145 = vmatpush.msra.mxu0 %v1102
  %1146 = vmatpush.msra.mxu0 %v1101
  %1147 = vmatpush.msra.mxu0 %v1100
  %1148 = vmatpush.msra.mxu0 %v1099
  %1149 = vmatpush.msra.mxu0 %v1098
  %1150 = vmatpush.msra.mxu0 %v1097
  %1151 = vmatpush.msra.mxu0 %v1096
  %1152 = vmatmul.f32.gmra.mxu0 %v1132
  %v1153 = vpop.f32.mrf.mxu0
  %v1154 = vadd.f32 %v1130, %v1153
  %1155 = vdwg.mxu0
  %1156 = vmatpush.msra.mxu0 %v1127
  %1157 = vmatpush.msra.mxu0 %v1126
  %1158 = vmatpush.msra.mxu0 %v1125
  %1159 = vmatpush.msra.mxu0 %v1124
  %1160 = vmatpush.msra.mxu0 %v1123
  %1161 = vmatpush.msra.mxu0 %v1122
  %1162 = vmatpush.msra.mxu0 %v1121
  %1163 = vmatpush.msra.mxu0 %v1120
  %1164 = vmatpush.msra.mxu0 %v1119
  %1165 = vmatpush.msra.mxu0 %v1118
  %1166 = vmatpush.msra.mxu0 %v1117
  %1167 = vmatpush.msra.mxu0 %v1116
  %1168 = vmatpush.msra.mxu0 %v1115
  %1169 = vmatpush.msra.mxu0 %v1114
  %1170 = vmatpush.msra.mxu0 %v1113
  %1171 = vmatpush.msra.mxu0 %v1112
  %1172 = vmatmul.f32.gmra.mxu0 %v1133
  %v1173 = vpop.f32.mrf.mxu0
  %v1174 = vadd.f32 %v1154, %v1173
  %1175 = vdwg.mxu0
  %1176 = vst [vmem:[%s7] sm:$0x1] %v1174
  // Predicated region
  $region30: #{_q_forward_impl.1} parent=0 // pred_check
    _
  $region31: #{_q_forward_impl.1} parent=0 // pred_check_branch
    %1178 = sbr.rel (0) target = $region33
  $region32: #{_q_forward_impl.1} parent=0 // pred_region
    _
  $region33: #{_q_forward_impl.1} parent=0 // pred_fallthru
    _
  // Predicated region
  $region34: #{_q_forward_impl.1} parent=0 // pred_check
    _
  $region35: #{_q_forward_impl.1} parent=0 // pred_check_branch
    %1180 = sbr.rel (0) target = $region37
  $region36: #{_q_forward_impl.1} parent=0 // pred_region
    _
  $region37: #{_q_forward_impl.1} parent=0 // pred_fallthru
    _

</llo_original>
